<compile_context>
chip_gen: v7x
topology: tpu7x:2x2x1
jax: 0.10.0
libtpu: 0.0.40
codegen_flags: <defaults>
</compile_context>

<pallas_src>
import functools

import jax
import jax.numpy as jnp
from jax import lax
from jax.experimental import pallas as pl
from jax.experimental.pallas import tpu as pltpu


def _mlp_kernel(x_ref, w1_ref, b1_ref, w2_ref, b2_ref, o_ref, *, use_softmax):
    # Lane-dense layout: batch rows live on the lane axis.
    #   x_ref : (TN, d_in)   row tile (streamed)
    #   w1_ref: (hid, d_in)  PyTorch layout, VMEM-resident
    #   b1_ref: (hid, 1)
    #   w2_ref: (d_out, hid)
    #   b2_ref: (d_out, 1)
    #   o_ref : (d_out, TN)  lane-dense output tile
    x = x_ref[...]

    # h1^T = W1 @ x^T : contract d_in (axis 1 of both) -> (hid, TN).  No
    # materialized transpose of x; the MXU consumes the NT form directly.
    h1t = jnp.tanh(
        lax.dot_general(
            w1_ref[...], x,
            dimension_numbers=(((1,), (1,)), ((), ())),
            preferred_element_type=jnp.float32,
        )
        + b1_ref[...]
    )

    # h2^T = W2 @ h1^T -> (d_out, TN)
    h2t = jnp.tanh(
        jnp.dot(w2_ref[...], h1t, preferred_element_type=jnp.float32) + b2_ref[...]
    )

    if use_softmax:
        # softmax over the feature axis (axis 0 in the transposed layout).
        m = jnp.max(h2t, axis=0, keepdims=True)
        e = jnp.exp(h2t - m)
        out = e / jnp.sum(e, axis=0, keepdims=True)
    else:
        # sigmoid(z) == 0.5 * (tanh(0.5 * z) + 1)  (exact; uses the EUP tanh path)
        out = 0.5 * (jnp.tanh(0.5 * h2t) + 1.0)

    o_ref[...] = out.astype(o_ref.dtype)


def _round_up(x, m):
    return ((x + m - 1) // m) * m


def _choose_tile(n, tile_n):
    """Pick a 128-aligned row tile.

    * padding bounded to <128 rows per grid step (tile = round_up(cdiv(n, steps), 128))
    * >=2 grid steps for large batches so both v7x TensorCores get work
      (no-op cost on single-TC v5e/v6e).
    """
    min_steps = 2 if n >= 1024 else 1
    steps = max(-(-n // tile_n), min_steps)
    return _round_up(-(-n // steps), 128)


def mlp_forward(x, w1, b1, w2, b2, *, tile_n=8192):
    """
    x  : (N, input_size) float32
    w1 : (hidden, input_size)  nn.Linear weight (PyTorch layout: out x in)
    b1 : (hidden,)
    w2 : (output_size, hidden) nn.Linear weight
    b2 : (output_size,)
    returns (N, output_size) float32
    """
    N, d_in = x.shape
    hidden = w1.shape[0]
    d_out = w2.shape[0]
    use_softmax = d_out > 1

    tile = _choose_tile(N, tile_n)
    n_pad = _round_up(N, tile)
    if n_pad != N:
        x = jnp.pad(x, ((0, n_pad - N), (0, 0)))
    grid = (n_pad // tile,)

    # Biases as column vectors so they broadcast along the lane (batch) axis.
    b1c = b1.reshape(hidden, 1)
    b2c = b2.reshape(d_out, 1)

    kernel = functools.partial(_mlp_kernel, use_softmax=use_softmax)

    out_t = pl.pallas_call(
        kernel,
        out_shape=jax.ShapeDtypeStruct((d_out, n_pad), x.dtype),
        grid_spec=pltpu.PrefetchScalarGridSpec(
            num_scalar_prefetch=0,
            grid=grid,
            in_specs=[
                pl.BlockSpec((tile, d_in), lambda i: (i, 0)),       # x row tile
                pl.BlockSpec((hidden, d_in), lambda i: (0, 0)),     # W1 (resident)
                pl.BlockSpec((hidden, 1), lambda i: (0, 0)),        # b1 (resident)
                pl.BlockSpec((d_out, hidden), lambda i: (0, 0)),    # W2 (resident)
                pl.BlockSpec((d_out, 1), lambda i: (0, 0)),         # b2 (resident)
            ],
            out_specs=pl.BlockSpec((d_out, tile), lambda i: (0, i)),  # lane-dense
        ),
        compiler_params=pltpu.CompilerParams(
            dimension_semantics=("parallel",),
        ),
    )(x, w1, b1c, w2, b2c)

    # Tiny (d_out, N) -> (N, d_out) transpose in the wrapper; cheap.
    return out_t[:, :N].T


def _reference(x, w1, b1, w2, b2):
    h1 = jnp.tanh(x @ w1.T + b1)
    h2 = jnp.tanh(h1 @ w2.T + b2)
    if w2.shape[0] > 1:
        m = jnp.max(h2, axis=-1, keepdims=True)
        e = jnp.exp(h2 - m)
        return e / jnp.sum(e, axis=-1, keepdims=True)
    return 1.0 / (1.0 + jnp.exp(-h2))


if __name__ == "__main__":
    key = jax.random.PRNGKey(0)
    k = jax.random.split(key, 6)

    # Small shapes implied by the module: batch of feature vectors, input_size=32,
    # hidden = input_size // 2 = 16.
    N, D_IN = 200, 32
    HID = D_IN // 2

    x = jax.random.normal(k[0], (N, D_IN), dtype=jnp.float32)
    w1 = jax.random.normal(k[1], (HID, D_IN), dtype=jnp.float32) * 0.1
    b1 = jax.random.normal(k[2], (HID,), dtype=jnp.float32) * 0.1

    # Branch 1: output_size > 1  -> softmax head.
    D_OUT = 4
    w2 = jax.random.normal(k[3], (D_OUT, HID), dtype=jnp.float32) * 0.1
    b2 = jax.random.normal(k[4], (D_OUT,), dtype=jnp.float32) * 0.1
    out = jax.block_until_ready(mlp_forward(x, w1, b1, w2, b2))
    ref = _reference(x, w1, b1, w2, b2)
    assert out.shape == (N, D_OUT)
    assert jnp.allclose(out, ref, atol=1e-5, rtol=1e-5), "softmax branch mismatch"

    # Branch 2: output_size == 1 -> sigmoid head.
    w2s = jax.random.normal(k[5], (1, HID), dtype=jnp.float32) * 0.1
    b2s = jnp.zeros((1,), dtype=jnp.float32)
    out_s = jax.block_until_ready(mlp_forward(x, w1, b1, w2s, b2s))
    ref_s = _reference(x, w1, b1, w2s, b2s)
    assert out_s.shape == (N, 1)
    assert jnp.allclose(out_s, ref_s, atol=1e-5, rtol=1e-5), "sigmoid branch mismatch"

    print("KERNEL_OK")
</pallas_src>

<mosaic_0001>
module attributes {stable_mosaic.version = 11 : i64} {
  func.func @_mlp_kernel(%arg0: i32, %arg1: memref<256x32xf32, #tpu.memory_space<vmem>>, %arg2: memref<16x32xf32, #tpu.memory_space<vmem>>, %arg3: memref<16x1xf32, #tpu.memory_space<vmem>>, %arg4: memref<4x16xf32, #tpu.memory_space<vmem>>, %arg5: memref<4x1xf32, #tpu.memory_space<vmem>>, %arg6: memref<4x256xf32, #tpu.memory_space<vmem>>) attributes {dimension_semantics = [#tpu.dimension_semantics<parallel>], iteration_bounds = array<i64: 1>, scalar_prefetch = 0 : i64, scratch_operands = 0 : i64, tpu.core_type = #tpu.core_type<tc>, window_params = [{transform_indices = @transform_0, window_bounds = array<i64: 256, 32>}, {pipeline_mode = #tpu.pipeline_mode<synchronous>, transform_indices = @transform_1, window_bounds = array<i64: 16, 32>}, {pipeline_mode = #tpu.pipeline_mode<synchronous>, transform_indices = @transform_2, window_bounds = array<i64: 16, 1>}, {pipeline_mode = #tpu.pipeline_mode<synchronous>, transform_indices = @transform_3, window_bounds = array<i64: 4, 16>}, {pipeline_mode = #tpu.pipeline_mode<synchronous>, transform_indices = @transform_4, window_bounds = array<i64: 4, 1>}, {transform_indices = @transform_5, window_bounds = array<i64: 4, 256>}]} {
    %c0 = arith.constant 0 : index
    %c0_0 = arith.constant 0 : index
    %0 = vector.load %arg1[%c0, %c0_0] : memref<256x32xf32, #tpu.memory_space<vmem>>, vector<256x32xf32>
    %c0_1 = arith.constant 0 : index
    %c0_2 = arith.constant 0 : index
    %1 = vector.load %arg2[%c0_1, %c0_2] : memref<16x32xf32, #tpu.memory_space<vmem>>, vector<16x32xf32>
    %cst = arith.constant dense<0.000000e+00> : vector<16x256xf32>
    %2 = tpu.matmul %1, %0, %cst {dimension_numbers = #tpu.dot_dimension_numbers<[1], [1], [0], [0], [0, 0, 1, 0], [], []>} : vector<16x32xf32>, vector<256x32xf32>, vector<16x256xf32> -> vector<16x256xf32>
    %c0_3 = arith.constant 0 : index
    %c0_4 = arith.constant 0 : index
    %3 = vector.load %arg3[%c0_3, %c0_4] : memref<16x1xf32, #tpu.memory_space<vmem>>, vector<16x1xf32>
    %4 = vector.broadcast %3 : vector<16x1xf32> to vector<16x256xf32>
    %5 = arith.addf %2, %4 : vector<16x256xf32>
    %6 = math.tanh %5 : vector<16x256xf32>
    %c0_5 = arith.constant 0 : index
    %c0_6 = arith.constant 0 : index
    %7 = vector.load %arg4[%c0_5, %c0_6] : memref<4x16xf32, #tpu.memory_space<vmem>>, vector<4x16xf32>
    %cst_7 = arith.constant dense<0.000000e+00> : vector<4x256xf32>
    %8 = tpu.matmul %7, %6, %cst_7 {dimension_numbers = #tpu.dot_dimension_numbers<[1], [0], [0], [1], [0, 0, 1, 1], [], []>} : vector<4x16xf32>, vector<16x256xf32>, vector<4x256xf32> -> vector<4x256xf32>
    %c0_8 = arith.constant 0 : index
    %c0_9 = arith.constant 0 : index
    %9 = vector.load %arg5[%c0_8, %c0_9] : memref<4x1xf32, #tpu.memory_space<vmem>>, vector<4x1xf32>
    %10 = vector.broadcast %9 : vector<4x1xf32> to vector<4x256xf32>
    %11 = arith.addf %8, %10 : vector<4x256xf32>
    %12 = math.tanh %11 : vector<4x256xf32>
    %cst_10 = arith.constant dense<0xFF800000> : vector<256xf32>
    %13 = vector.multi_reduction <maximumf>, %12, %cst_10 [0] : vector<4x256xf32> to vector<256xf32>
    %14 = vector.shape_cast %13 : vector<256xf32> to vector<1x256xf32>
    %15 = vector.broadcast %14 : vector<1x256xf32> to vector<4x256xf32>
    %16 = arith.subf %12, %15 : vector<4x256xf32>
    %17 = math.exp %16 : vector<4x256xf32>
    %cst_11 = arith.constant dense<0.000000e+00> : vector<256xf32>
    %18 = vector.multi_reduction <add>, %17, %cst_11 [0] : vector<4x256xf32> to vector<256xf32>
    %19 = vector.shape_cast %18 : vector<256xf32> to vector<1x256xf32>
    %20 = vector.broadcast %19 : vector<1x256xf32> to vector<4x256xf32>
    %21 = arith.divf %17, %20 : vector<4x256xf32>
    %c0_12 = arith.constant 0 : index
    %c0_13 = arith.constant 0 : index
    %22 = vector.load %arg6[%c0_12, %c0_13] : memref<4x256xf32, #tpu.memory_space<vmem>>, vector<4x256xf32>
    tpu.vector_store %arg6[%c0_12, %c0_13], %21 {strides = array<i32>} : memref<4x256xf32, #tpu.memory_space<vmem>>, vector<4x256xf32>,
    return
  }
  func.func @transform_0(%arg0: i32) -> (i32, i32) {
    %c0_i32 = arith.constant 0 : i32
    %c0_i32_0 = arith.constant 0 : i32
    return %arg0, %c0_i32 : i32, i32
  }
  func.func @transform_1(%arg0: i32) -> (i32, i32) {
    %c0_i32 = arith.constant 0 : i32
    %c0_i32_0 = arith.constant 0 : i32
    %c0_i32_1 = arith.constant 0 : i32
    return %c0_i32, %c0_i32_0 : i32, i32
  }
  func.func @transform_2(%arg0: i32) -> (i32, i32) {
    %c0_i32 = arith.constant 0 : i32
    %c0_i32_0 = arith.constant 0 : i32
    %c0_i32_1 = arith.constant 0 : i32
    return %c0_i32, %c0_i32_0 : i32, i32
  }
  func.func @transform_3(%arg0: i32) -> (i32, i32) {
    %c0_i32 = arith.constant 0 : i32
    %c0_i32_0 = arith.constant 0 : i32
    %c0_i32_1 = arith.constant 0 : i32
    return %c0_i32, %c0_i32_0 : i32, i32
  }
  func.func @transform_4(%arg0: i32) -> (i32, i32) {
    %c0_i32 = arith.constant 0 : i32
    %c0_i32_0 = arith.constant 0 : i32
    %c0_i32_1 = arith.constant 0 : i32
    return %c0_i32, %c0_i32_0 : i32, i32
  }
  func.func @transform_5(%arg0: i32) -> (i32, i32) {
    %c0_i32 = arith.constant 0 : i32
    %c0_i32_0 = arith.constant 0 : i32
    return %c0_i32, %arg0 : i32, i32
  }
}

</mosaic_0001>

<llo_original>
// kernel: tpu_custom_call.1
$region0: #{tpu_custom_call.1}
  #allocation0 [shape = 'u32[]', space=smem, size = 0x4, offset = 0x4, fixed_abs, tag = 'smem constant byte address 0x4 - core index']
  #allocation1 [shape = 'u32[144,128]{1,0:T(1,128)}', space=vmem, size = 0x12000, scoped, tag = 'internal scratch']
  %s0 = inlined_call_operand.vmem [shape: f32[256,32], index: 0, kind: input, shape index: {}]
  %s1 = inlined_call_operand.vmem [shape: f32[16,32], index: 1, kind: input, shape index: {}]
  %s2 = inlined_call_operand.vmem [shape: f32[16,1], index: 2, kind: input, shape index: {}]
  %s3 = inlined_call_operand.vmem [shape: f32[4,16], index: 3, kind: input, shape index: {}]
  %s4 = inlined_call_operand.vmem [shape: f32[4,1], index: 4, kind: input, shape index: {}]
  %s5 = inlined_call_operand.hbm [shape: f32[4,256], index: 5, kind: output, shape index: {}]
  %s6 = sld [smem:[#allocation0]]
  $region30: #{tpu_custom_call.1} parent=0
    _
  %s8 = ssub.s32 1, %s6
  %s9 = scalar_select 0, %s8, %s6
  $region1: #{tpu_custom_call.1} parent=0
    #allocation2 [shape = 'u8[4096]{0}', space=vmem, size = 0x1000, scoped, tag = 'output window, operand 0, single buffered']
    #allocation3 [shape = 's32[1]{0}', space=sflag, size = 0x4, scoped, tag = 'scoped memory for tpu_custom_call.1']
    %10 = vsyncpa [#allocation3], 0
    // Predicated region
    $region2: #{tpu_custom_call.1} parent=1 // pred_check
      _
    $region3: #{tpu_custom_call.1} parent=1 // pred_check_branch
      %12 = sbr.rel (0) target = $region5
    $region4: #{tpu_custom_call.1} parent=1 // pred_region
      _
    $region5: #{tpu_custom_call.1} parent=1 // pred_fallthru
      _
    // Predicated region
    $region6: #{tpu_custom_call.1} parent=1 // pred_check
      _
    $region7: #{tpu_custom_call.1} parent=1 // pred_check_branch
      %14 = sbr.rel (0) target = $region9
    $region8: #{tpu_custom_call.1} parent=1 // pred_region
      _
    $region9: #{tpu_custom_call.1} parent=1 // pred_fallthru
      _
    // Predicated region
    $region10: #{tpu_custom_call.1} parent=1 // pred_check
      _
    $region11: #{tpu_custom_call.1} parent=1 // pred_check_branch
      %16 = sbr.rel (0) target = $region13
    $region12: #{tpu_custom_call.1} parent=1 // pred_region
      _
    $region13: #{tpu_custom_call.1} parent=1 // pred_fallthru
      _
    // Predicated region
    $region14: #{tpu_custom_call.1} parent=1 // pred_check
      _
    $region15: #{tpu_custom_call.1} parent=1 // pred_check_branch
      %18 = sbr.rel (0) target = $region17
    $region16: #{tpu_custom_call.1} parent=1 // pred_region
      _
    $region17: #{tpu_custom_call.1} parent=1 // pred_fallthru
      _
    // Predicated region
    $region18: #{tpu_custom_call.1} parent=1 // pred_check
      _
    $region19: #{tpu_custom_call.1} parent=1 // pred_check_branch
      %20 = sbr.rel (0) target = $region21
    $region20: #{tpu_custom_call.1} parent=1 // pred_region
      _
    $region21: #{tpu_custom_call.1} parent=1 // pred_fallthru
      _
    %v21 = vld [vmem:[%s0] sm:$0xff]
    %v22 = vld [vmem:[%s0 + $0x8] sm:$0xff]
    %v23 = vld [vmem:[%s0 + $0x10] sm:$0xff]
    %v24 = vld [vmem:[%s0 + $0x18] sm:$0xff]
    %v25 = vld [vmem:[%s0 + $0x20] sm:$0xff]
    %v26 = vld [vmem:[%s0 + $0x28] sm:$0xff]
    %v27 = vld [vmem:[%s0 + $0x30] sm:$0xff]
    %v28 = vld [vmem:[%s0 + $0x38] sm:$0xff]
    %v29 = vld [vmem:[%s0 + $0x40] sm:$0xff]
    %v30 = vld [vmem:[%s0 + $0x48] sm:$0xff]
    %v31 = vld [vmem:[%s0 + $0x50] sm:$0xff]
    %v32 = vld [vmem:[%s0 + $0x58] sm:$0xff]
    %v33 = vld [vmem:[%s0 + $0x60] sm:$0xff]
    %v34 = vld [vmem:[%s0 + $0x68] sm:$0xff]
    %v35 = vld [vmem:[%s0 + $0x70] sm:$0xff]
    %v36 = vld [vmem:[%s0 + $0x78] sm:$0xff]
    %v37 = vld [vmem:[%s0 + $0x80] sm:$0xff]
    %v38 = vld [vmem:[%s0 + $0x88] sm:$0xff]
    %v39 = vld [vmem:[%s0 + $0x90] sm:$0xff]
    %v40 = vld [vmem:[%s0 + $0x98] sm:$0xff]
    %v41 = vld [vmem:[%s0 + $0xa0] sm:$0xff]
    %v42 = vld [vmem:[%s0 + $0xa8] sm:$0xff]
    %v43 = vld [vmem:[%s0 + $0xb0] sm:$0xff]
    %v44 = vld [vmem:[%s0 + $0xb8] sm:$0xff]
    %v45 = vld [vmem:[%s0 + $0xc0] sm:$0xff]
    %v46 = vld [vmem:[%s0 + $0xc8] sm:$0xff]
    %v47 = vld [vmem:[%s0 + $0xd0] sm:$0xff]
    %v48 = vld [vmem:[%s0 + $0xd8] sm:$0xff]
    %v49 = vld [vmem:[%s0 + $0xe0] sm:$0xff]
    %v50 = vld [vmem:[%s0 + $0xe8] sm:$0xff]
    %v51 = vld [vmem:[%s0 + $0xf0] sm:$0xff]
    %v52 = vld [vmem:[%s0 + $0xf8] sm:$0xff]
    %v53 = vld [vmem:[%s1] sm:$0xff]
    %v54 = vld [vmem:[%s1 + $0x8] sm:$0xff]
    %v55 = vld [vmem:[%s2] sm:$0xff]
    %v56 = vld [vmem:[%s2 + $0x8] sm:$0xff]
    %58 = vset.pattern.permute.xlu0 0
    %59 = vperm.xlu0 %58, %v55
    %v60 = vpop.permute.xlu0 %59
    %63 = vset.pattern.permute.xlu0 0
    %64 = vperm.xlu0 %63, %v56
    %v65 = vpop.permute.xlu0 %64
    %vm67 = vcmask 261120
    %v69 = vsel %vm67, %v53, 0
    %v72 = vsel %vm67, %v54, 0
    %v75 = vsel %vm67, %v21, 0
    %v78 = vsel %vm67, %v22, 0
    %v81 = vsel %vm67, %v23, 0
    %v84 = vsel %vm67, %v24, 0
    %v87 = vsel %vm67, %v25, 0
    %v90 = vsel %vm67, %v26, 0
    %v93 = vsel %vm67, %v27, 0
    %v96 = vsel %vm67, %v28, 0
    %v99 = vsel %vm67, %v29, 0
    %v102 = vsel %vm67, %v30, 0
    %v105 = vsel %vm67, %v31, 0
    %v108 = vsel %vm67, %v32, 0
    %v111 = vsel %vm67, %v33, 0
    %v114 = vsel %vm67, %v34, 0
    %v117 = vsel %vm67, %v35, 0
    %v120 = vsel %vm67, %v36, 0
    %v123 = vsel %vm67, %v37, 0
    %v126 = vsel %vm67, %v38, 0
    %v129 = vsel %vm67, %v39, 0
    %v132 = vsel %vm67, %v40, 0
    %v135 = vsel %vm67, %v41, 0
    %v138 = vsel %vm67, %v42, 0
    %v141 = vsel %vm67, %v43, 0
    %v144 = vsel %vm67, %v44, 0
    %v147 = vsel %vm67, %v45, 0
    %v150 = vsel %vm67, %v46, 0
    %v153 = vsel %vm67, %v47, 0
    %v156 = vsel %vm67, %v48, 0
    %v159 = vsel %vm67, %v49, 0
    %v162 = vsel %vm67, %v50, 0
    %v165 = vsel %vm67, %v51, 0
    %v168 = vsel %vm67, %v52, 0
    %170 = vmatprep.subr.mxu0 0.0
    %171 = vmatpush1.xpose.msra.mxu0 %v75
    %172 = vmatprep.subr.mxu0 0.0
    %173 = vmatpush1.xpose.msra.mxu0 %v78
    %174 = vmatprep.subr.mxu0 0.0
    %175 = vmatpush1.xpose.msra.mxu0 %v81
    %176 = vmatprep.subr.mxu0 0.0
    %177 = vmatpush1.xpose.msra.mxu0 %v84
    %178 = vmatprep.subr.mxu0 0.0
    %179 = vmatpush1.xpose.msra.mxu0 %v87
    %180 = vmatprep.subr.mxu0 0.0
    %181 = vmatpush1.xpose.msra.mxu0 %v90
    %182 = vmatprep.subr.mxu0 0.0
    %183 = vmatpush1.xpose.msra.mxu0 %v93
    %184 = vmatprep.subr.mxu0 0.0
    %185 = vmatpush1.xpose.msra.mxu0 %v96
    %186 = vmatprep.subr.mxu0 0.0
    %187 = vmatpush1.xpose.msra.mxu0 %v99
    %188 = vmatprep.subr.mxu0 0.0
    %189 = vmatpush1.xpose.msra.mxu0 %v102
    %190 = vmatprep.subr.mxu0 0.0
    %191 = vmatpush1.xpose.msra.mxu0 %v105
    %192 = vmatprep.subr.mxu0 0.0
    %193 = vmatpush1.xpose.msra.mxu0 %v108
    %194 = vmatprep.subr.mxu0 0.0
    %195 = vmatpush1.xpose.msra.mxu0 %v111
    %196 = vmatprep.subr.mxu0 0.0
    %197 = vmatpush1.xpose.msra.mxu0 %v114
    %198 = vmatprep.subr.mxu0 0.0
    %199 = vmatpush1.xpose.msra.mxu0 %v117
    %200 = vmatprep.subr.mxu0 0.0
    %201 = vmatpush1.xpose.msra.mxu0 %v120
    %202 = vmatprep.subr.mxu0 0.0
    %203 = vmatpush1.xpose.msra.mxu0 %v123
    %204 = vmatprep.subr.mxu0 0.0
    %205 = vmatpush1.xpose.msra.mxu0 %v126
    %206 = vmatprep.subr.mxu0 0.0
    %207 = vmatpush1.xpose.msra.mxu0 %v129
    %208 = vmatprep.subr.mxu0 0.0
    %209 = vmatpush1.xpose.msra.mxu0 %v132
    %210 = vmatprep.subr.mxu0 0.0
    %211 = vmatpush1.xpose.msra.mxu0 %v135
    %212 = vmatprep.subr.mxu0 0.0
    %213 = vmatpush1.xpose.msra.mxu0 %v138
    %214 = vmatprep.subr.mxu0 0.0
    %215 = vmatpush1.xpose.msra.mxu0 %v141
    %216 = vmatprep.subr.mxu0 0.0
    %217 = vmatpush1.xpose.msra.mxu0 %v144
    %218 = vmatprep.subr.mxu0 0.0
    %219 = vmatpush1.xpose.msra.mxu0 %v147
    %220 = vmatprep.subr.mxu0 0.0
    %221 = vmatpush1.xpose.msra.mxu0 %v150
    %222 = vmatprep.subr.mxu0 0.0
    %223 = vmatpush1.xpose.msra.mxu0 %v153
    %224 = vmatprep.subr.mxu0 0.0
    %225 = vmatpush1.xpose.msra.mxu0 %v156
    %226 = vmatprep.subr.mxu0 0.0
    %227 = vmatpush1.xpose.msra.mxu0 %v159
    %228 = vmatprep.subr.mxu0 0.0
    %229 = vmatpush1.xpose.msra.mxu0 %v162
    %230 = vmatprep.subr.mxu0 0.0
    %231 = vmatpush1.xpose.msra.mxu0 %v165
    %232 = vmatprep.subr.mxu0 0.0
    %233 = vmatpush1.xpose.msra.mxu0 %v168
    %234 = vmatprep.mubr.f32.mxu0 0.0
    %235 = vmatmul.mubr.f32.gmra.mrb[0].mxu0 %v69
    %v236 = vpop.f32.mrb[0].mxu0
    %v237 = vadd.f32 %v60, %v236
    %v238 = vpop.f32.mrb[0].mxu0
    %v239 = vadd.f32 %v60, %v238
    %240 = vmatprep.mubr.f32.mxu0 0.0
    %241 = vmatmul.mubr.f32.gmra.mrb[0].mxu0 %v72
    %v242 = vpop.f32.mrb[0].mxu0
    %v243 = vadd.f32 %v65, %v242
    %v244 = vpop.f32.mrb[0].mxu0
    %v245 = vadd.f32 %v65, %v244
    %246 = vdwg.mxu0
    %v247 = vtanh.pop %v237
    %v248 = vtanh.pop %v239
    %v249 = vtanh.pop %v243
    %v250 = vtanh.pop %v245
    %v251 = vld [vmem:[%s3] sm:$0xf]
    %v252 = vld [vmem:[%s4] sm:$0xf]
    %254 = vset.pattern.permute.xlu0 0
    %255 = vperm.xlu0 %254, %v252
    %v256 = vpop.permute.xlu0 %255
    %vm258 = vcmask 130048
    %v260 = vsel %vm258, %v251, 0
    %262 = vmatprep.subr.mxu0 %v248
    %263 = vmatpush1.msra.mxu0 %v247
    %264 = vmatprep.subr.mxu0 %v250
    %265 = vmatpush1.msra.mxu0 %v249
    %266 = vmatprep.subr.mxu0 0.0
    %267 = vmatpush1.msra.mxu0 0.0
    %268 = vmatprep.subr.mxu0 0.0
    %269 = vmatpush1.msra.mxu0 0.0
    %270 = vmatprep.subr.mxu0 0.0
    %271 = vmatpush1.msra.mxu0 0.0
    %272 = vmatprep.subr.mxu0 0.0
    %273 = vmatpush1.msra.mxu0 0.0
    %274 = vmatprep.subr.mxu0 0.0
    %275 = vmatpush1.msra.mxu0 0.0
    %276 = vmatprep.subr.mxu0 0.0
    %277 = vmatpush1.msra.mxu0 0.0
    %278 = vmatprep.subr.mxu0 0.0
    %279 = vmatpush1.msra.mxu0 0.0
    %280 = vmatprep.subr.mxu0 0.0
    %281 = vmatpush1.msra.mxu0 0.0
    %282 = vmatprep.subr.mxu0 0.0
    %283 = vmatpush1.msra.mxu0 0.0
    %284 = vmatprep.subr.mxu0 0.0
    %285 = vmatpush1.msra.mxu0 0.0
    %286 = vmatprep.subr.mxu0 0.0
    %287 = vmatpush1.msra.mxu0 0.0
    %288 = vmatprep.subr.mxu0 0.0
    %289 = vmatpush1.msra.mxu0 0.0
    %290 = vmatprep.subr.mxu0 0.0
    %291 = vmatpush1.msra.mxu0 0.0
    %292 = vmatprep.subr.mxu0 0.0
    %293 = vmatpush1.msra.mxu0 0.0
    %294 = vmatprep.subr.mxu0 0.0
    %295 = vmatpush1.msra.mxu0 0.0
    %296 = vmatprep.subr.mxu0 0.0
    %297 = vmatpush1.msra.mxu0 0.0
    %298 = vmatprep.subr.mxu0 0.0
    %299 = vmatpush1.msra.mxu0 0.0
    %300 = vmatprep.subr.mxu0 0.0
    %301 = vmatpush1.msra.mxu0 0.0
    %302 = vmatprep.subr.mxu0 0.0
    %303 = vmatpush1.msra.mxu0 0.0
    %304 = vmatprep.subr.mxu0 0.0
    %305 = vmatpush1.msra.mxu0 0.0
    %306 = vmatprep.subr.mxu0 0.0
    %307 = vmatpush1.msra.mxu0 0.0
    %308 = vmatprep.subr.mxu0 0.0
    %309 = vmatpush1.msra.mxu0 0.0
    %310 = vmatprep.subr.mxu0 0.0
    %311 = vmatpush1.msra.mxu0 0.0
    %312 = vmatprep.subr.mxu0 0.0
    %313 = vmatpush1.msra.mxu0 0.0
    %314 = vmatprep.subr.mxu0 0.0
    %315 = vmatpush1.msra.mxu0 0.0
    %316 = vmatprep.subr.mxu0 0.0
    %317 = vmatpush1.msra.mxu0 0.0
    %318 = vmatprep.subr.mxu0 0.0
    %319 = vmatpush1.msra.mxu0 0.0
    %320 = vmatprep.subr.mxu0 0.0
    %321 = vmatpush1.msra.mxu0 0.0
    %322 = vmatprep.subr.mxu0 0.0
    %323 = vmatpush1.msra.mxu0 0.0
    %324 = vmatprep.subr.mxu0 0.0
    %325 = vmatpush1.msra.mxu0 0.0
    %326 = vmatprep.mubr.f32.mxu0 0.0
    %327 = vmatmul.mubr.f32.gmra.mrb[0].mxu0 %v260
    %v328 = vpop.f32.mrb[0].mxu0
    %v329 = vadd.f32 %v256, %v328
    %v330 = vpop.f32.mrb[0].mxu0
    %v331 = vadd.f32 %v256, %v330
    %332 = vdwg.mxu0
    %v333 = vtanh.pop %v329
    %v334 = vtanh.pop %v331
    %vm335 = vcmask 1043456
    %v336 = vsel %vm335, %v333, -inf
    %v337 = vrot.slane %v336, 4
    %v338 = vmax.f32 %v336, %v337
    %v339 = vrot.slane %v338, 2
    %v340 = vmax.f32 %v338, %v339
    %v341 = vrot.slane %v340, 1
    %v342 = vmax.f32 %v340, %v341
    %v343 = vsel %vm335, %v334, -inf
    %v344 = vrot.slane %v343, 4
    %v345 = vmax.f32 %v343, %v344
    %v346 = vrot.slane %v345, 2
    %v347 = vmax.f32 %v345, %v346
    %v348 = vrot.slane %v347, 1
    %v349 = vmax.f32 %v347, %v348
    %v350 = vsub.f32 %v333, %v342
    %v351 = vsub.f32 %v334, %v349
    %v352 = vmul.f32 %v350, 1.442695
    %v353 = vpow.pop %v352
    %v354 = vmul.f32 %v351, 1.442695
    %v355 = vpow.pop %v354
    %v356 = vsel %vm335, %v353, 0.0
    %v357 = vrot.slane %v356, 4
    %v358 = vadd.f32 %v356, %v357
    %v359 = vrot.slane %v358, 2
    %v360 = vadd.f32 %v358, %v359
    %v361 = vrot.slane %v360, 1
    %v362 = vadd.f32 %v360, %v361
    %v363 = vsel %vm335, %v355, 0.0
    %v364 = vrot.slane %v363, 4
    %v365 = vadd.f32 %v363, %v364
    %v366 = vrot.slane %v365, 2
    %v367 = vadd.f32 %v365, %v366
    %v368 = vrot.slane %v367, 1
    %v369 = vadd.f32 %v367, %v368
    %v370 = vrcp.pop %v362
    %v371 = vmul.f32 %v353, %v370
    %v372 = vrcp.pop %v369
    %v373 = vmul.f32 %v355, %v372
    %v376 = vcombine.low %v371, %v373
    %378 = vst [vmem:[#allocation2] sm:$0xff] %v376
    // Predicated region
    $region22: #{tpu_custom_call.1} parent=1 // pred_check
      _
    $region23: #{tpu_custom_call.1} parent=1 // pred_check_branch
      %380 = sbr.rel (0) target = $region25
    $region24: #{tpu_custom_call.1} parent=1 // pred_region
      %s382 = ssub.s32 128, 128
      %383 = vsyncadd [#allocation3], %s382
      %s385 = sshll.u32 [#allocation2], 4
      %s386 = int_to_ptr.vmem [resolvable:$true] %s385
      %388 = dma.vmem_to_hbm [thread:$0]  %s386, 128, %s5, [#allocation3]
    $region25: #{tpu_custom_call.1} parent=1 // pred_fallthru
      _
    // Predicated region
    $region26: #{tpu_custom_call.1} parent=1 // pred_check
      _
    $region27: #{tpu_custom_call.1} parent=1 // pred_check_branch
      %390 = sbr.rel (0) target = $region29
    $region28: #{tpu_custom_call.1} parent=1 // pred_region
      %391 = dma.done [#allocation3], 128
    $region29: #{tpu_custom_call.1} parent=1 // pred_fallthru
      _
    %392 = vsyncpa [#allocation3], 1

</llo_original>
